<compile_context>
chip_gen: v6e
topology: v6e:2x2x1
jax: 0.10.0
libtpu: 0.0.40
codegen_flags: <defaults>
</compile_context>

<pallas_src>
import numpy as np
import jax
import jax.numpy as jnp
from jax import lax
from jax.experimental import pallas as pl
from jax.experimental.pallas import tpu as pltpu


# ---------------------------------------------------------------------------
# Host-side construction of the PGA geometric-product table and reverse signs
# (replaces gatr's _load_bilinear_basis('gp') / reverse mask .pt files).
# Basis order: [1, e0, e1, e2, e3, e01, e02, e03, e12, e13, e23,
#               e012, e013, e023, e123, e0123], metric diag(0, 1, 1, 1).
# ---------------------------------------------------------------------------
_BLADES = [
    (), (0,), (1,), (2,), (3,),
    (0, 1), (0, 2), (0, 3), (1, 2), (1, 3), (2, 3),
    (0, 1, 2), (0, 1, 3), (0, 2, 3), (1, 2, 3),
    (0, 1, 2, 3),
]
_METRIC = {0: 0.0, 1: 1.0, 2: 1.0, 3: 1.0}  # e0^2 = 0, e1^2 = e2^2 = e3^2 = 1


def _blade_product(a, b):
    """Geometric product of two basis blades -> (sign, resulting blade tuple)."""
    lst = list(a) + list(b)
    sign = 1.0
    changed = True
    while changed:  # bubble-sort generators, each swap flips the sign
        changed = False
        for i in range(len(lst) - 1):
            if lst[i] > lst[i + 1]:
                lst[i], lst[i + 1] = lst[i + 1], lst[i]
                sign = -sign
                changed = True
    out, i = [], 0
    while i < len(lst):  # contract repeated adjacent generators with the metric
        if i + 1 < len(lst) and lst[i] == lst[i + 1]:
            sign *= _METRIC[lst[i]]
            i += 2
        else:
            out.append(lst[i])
            i += 1
    return sign, tuple(out)


def build_gp_basis():
    """gp[i, j, k]: coefficient of basis blade i in (e_j * e_k)."""
    gp = np.zeros((16, 16, 16), dtype=np.float32)
    index = {b: i for i, b in enumerate(_BLADES)}
    for j, bj in enumerate(_BLADES):
        for k, bk in enumerate(_BLADES):
            sign, blade = _blade_product(bj, bk)
            if sign != 0.0:
                gp[index[blade], j, k] += sign
    return gp


def build_reverse_signs():
    """Reverse anti-automorphism signs: (-1)^(g(g-1)/2) per grade g."""
    return np.array(
        [(-1.0) ** (len(b) * (len(b) - 1) // 2) for b in _BLADES], dtype=np.float32
    )


_GP_NP = build_gp_basis()        # gp[i, j, k]
_REV_NP = build_reverse_signs()  # rev[k]

# Reverse folded into the second-operand (k) axis, rearranged so a single
# (16, 256) matmul computes  S[m, j*16+i] = sum_k T[m,k] * gp[i,j,k] * rev[k].
# _GPK_NP[k, j*16+i] = gp[i, j, k] * rev[k]
_GPK_NP = (_GP_NP * _REV_NP[None, None, :]).transpose(2, 1, 0).reshape(16, 256)


# ---------------------------------------------------------------------------
# Pallas kernel: one lane-dense MXU matmul per (batch, n-tile, m-tile).
# ---------------------------------------------------------------------------
def _rel_trafo_matmul_kernel(xn_ref, r_ref, out_ref):
    # xn_ref : (tn, 16)      multivectors of the n-tile (channel index j)
    # r_ref  : (16, tm*16)   R[j, m*16+i] = sum_k gp[i,j,k]*rev[k]*T[m,k] for the m-tile
    # out_ref: (tn, tm*16)   out[n, m*16+i]   (lane-dense, final memory layout)
    out_ref[...] = jnp.dot(
        xn_ref[...], r_ref[...], preferred_element_type=jnp.float32
    ).astype(out_ref.dtype)


def _pick_tile(n):
    """Largest power-of-two tile (<=128) dividing n; otherwise the full extent."""
    for t in (128, 64, 32, 16, 8):
        if n % t == 0:
            return t
    # Non-multiple-of-8 N: use one full-size block (block dims == array dims).
    # TODO(synk): pad N for very large N that is not a multiple of 8.
    return n


def _global_rel_trafo_impl(T):
    """T: (B, N, 16) float32 -> (B, N, N, 16), matching the PyTorch module."""
    B, N, C = T.shape
    assert C == 16
    gpk = jnp.asarray(_GPK_NP, dtype=T.dtype)  # (16, 256) compile-time constant

    # ---- cheap O(B*N) stage 1 in XLA:  S[b, m, j*16+i] = sum_k T[b,m,k] gp'[i,j,k]
    S = lax.dot_general(
        T, gpk, (((2,), (0,)), ((), ())), precision=lax.Precision.HIGHEST
    )  # (B, N, 256)
    # Layout plumbing on the *small* intermediate only: R[b, j, m*16+i].
    R = S.reshape(B, N, 16, 16).transpose(0, 2, 1, 3).reshape(B, 16, N * 16)

    tn = tm = _pick_tile(N)

    out = pl.pallas_call(
        _rel_trafo_matmul_kernel,
        out_shape=jax.ShapeDtypeStruct((B, N, N * 16), T.dtype),
        grid_spec=pltpu.PrefetchScalarGridSpec(
            num_scalar_prefetch=0,
            # n-blocks innermost: the R block index is constant across consecutive
            # steps, so it is not re-DMA'd; x_n (8 KiB) is the only per-step refetch.
            grid=(B, N // tm, N // tn),
            in_specs=[
                pl.BlockSpec((None, tn, 16), lambda b, mj, ni: (b, ni, 0)),        # x_n
                pl.BlockSpec((None, 16, tm * 16), lambda b, mj, ni: (b, 0, mj)),   # R
            ],
            out_specs=pl.BlockSpec(
                (None, tn, tm * 16), lambda b, mj, ni: (b, ni, mj)
            ),
        ),
        compiler_params=pltpu.CompilerParams(
            # Every grid point writes a distinct output block -> all parallel
            # (lets v7x shard the grid over both TensorCores).
            dimension_semantics=("parallel", "parallel", "parallel"),
        ),
    )(T, R)

    # Free metadata reshape: (B, N, N*16) and (B, N, N, 16) share the same layout.
    return out.reshape(B, N, N, 16)


global_rel_trafo = jax.jit(_global_rel_trafo_impl)


# ---------------------------------------------------------------------------
# Main
# ---------------------------------------------------------------------------
if __name__ == "__main__":
    def reference(T):
        gp = jnp.asarray(_GP_NP)
        v_inv = T * jnp.asarray(_REV_NP)[None, None, :]
        return jnp.einsum(
            "ijk,bnj,bmk->bnmi", gp, T, v_inv, precision=lax.Precision.HIGHEST
        )

    # Small demo shape (batch=2, N_res=8).
    key = jax.random.PRNGKey(0)
    B, N = 2, 8
    T = jax.random.normal(key, (B, N, 16), dtype=jnp.float32)
    out = jax.block_until_ready(global_rel_trafo(T))
    assert out.shape == (B, N, N, 16)
    np.testing.assert_allclose(
        np.asarray(out), np.asarray(reference(T)), rtol=1e-4, atol=1e-4
    )

    # Also exercise the tiled multi-block path (2x2 tiles of 128).
    T2 = jax.random.normal(jax.random.PRNGKey(1), (1, 256, 16), dtype=jnp.float32)
    out2 = jax.block_until_ready(global_rel_trafo(T2))
    assert out2.shape == (1, 256, 256, 16)
    np.testing.assert_allclose(
        np.asarray(out2), np.asarray(reference(T2)), rtol=1e-4, atol=1e-4
    )

    print("KERNEL_OK")
</pallas_src>

<mosaic_0001>
module attributes {stable_mosaic.version = 11 : i64} {
  func.func @_rel_trafo_matmul_kernel(%arg0: i32, %arg1: i32, %arg2: i32, %arg3: memref<1x8x16xf32, #tpu.memory_space<vmem>>, %arg4: memref<1x16x128xf32, #tpu.memory_space<vmem>>, %arg5: memref<1x8x128xf32, #tpu.memory_space<vmem>>) attributes {dimension_semantics = [#tpu.dimension_semantics<parallel>, #tpu.dimension_semantics<parallel>, #tpu.dimension_semantics<parallel>], iteration_bounds = array<i64: 2, 1, 1>, scalar_prefetch = 0 : i64, scratch_operands = 0 : i64, tpu.core_type = #tpu.core_type<tc>, window_params = [{transform_indices = @transform_0, window_bounds = array<i64: 1, 8, 16>}, {transform_indices = @transform_1, window_bounds = array<i64: 1, 16, 128>}, {transform_indices = @transform_2, window_bounds = array<i64: 1, 8, 128>}]} {
    %c0 = arith.constant 0 : index
    %c0_0 = arith.constant 0 : index
    %c0_1 = arith.constant 0 : index
    %0 = vector.load %arg3[%c0, %c0_0, %c0_1] : memref<1x8x16xf32, #tpu.memory_space<vmem>>, vector<1x8x16xf32>
    %1 = vector.shape_cast %0 : vector<1x8x16xf32> to vector<8x16xf32>
    %c0_2 = arith.constant 0 : index
    %c0_3 = arith.constant 0 : index
    %c0_4 = arith.constant 0 : index
    %2 = vector.load %arg4[%c0_2, %c0_3, %c0_4] : memref<1x16x128xf32, #tpu.memory_space<vmem>>, vector<1x16x128xf32>
    %3 = vector.shape_cast %2 : vector<1x16x128xf32> to vector<16x128xf32>
    %cst = arith.constant dense<0.000000e+00> : vector<8x128xf32>
    %4 = tpu.matmul %1, %3, %cst {dimension_numbers = #tpu.dot_dimension_numbers<[1], [0], [0], [1], [0, 0, 1, 1], [], []>} : vector<8x16xf32>, vector<16x128xf32>, vector<8x128xf32> -> vector<8x128xf32>
    %c0_5 = arith.constant 0 : index
    %c0_6 = arith.constant 0 : index
    %c0_7 = arith.constant 0 : index
    %5 = vector.load %arg5[%c0_5, %c0_6, %c0_7] : memref<1x8x128xf32, #tpu.memory_space<vmem>>, vector<1x8x128xf32>
    %6 = vector.shape_cast %5 : vector<1x8x128xf32> to vector<8x128xf32>
    %7 = vector.shape_cast %4 : vector<8x128xf32> to vector<1x8x128xf32>
    tpu.vector_store %arg5[%c0_5, %c0_6, %c0_7], %7 {strides = array<i32>} : memref<1x8x128xf32, #tpu.memory_space<vmem>>, vector<1x8x128xf32>,
    return
  }
  func.func @transform_0(%arg0: i32, %arg1: i32, %arg2: i32) -> (i32, i32, i32) {
    %c0_i32 = arith.constant 0 : i32
    %c0_i32_0 = arith.constant 0 : i32
    return %arg0, %arg2, %c0_i32 : i32, i32, i32
  }
  func.func @transform_1(%arg0: i32, %arg1: i32, %arg2: i32) -> (i32, i32, i32) {
    %c0_i32 = arith.constant 0 : i32
    %c0_i32_0 = arith.constant 0 : i32
    return %arg0, %c0_i32, %arg1 : i32, i32, i32
  }
  func.func @transform_2(%arg0: i32, %arg1: i32, %arg2: i32) -> (i32, i32, i32) {
    %c0_i32 = arith.constant 0 : i32
    return %arg0, %arg2, %arg1 : i32, i32, i32
  }
}

</mosaic_0001>

<llo_original>
// kernel: _global_rel_trafo_impl.1
$region0: #{_global_rel_trafo_impl.1}
  #allocation0 [shape = 'u32[]', space=smem, size = 0x4, offset = 0x4, fixed_abs, tag = 'smem constant byte address 0x4 - core index']
  #allocation1 [shape = 'u32[144,128]{1,0:T(1,128)}', space=vmem, size = 0x12000, scoped, tag = 'internal scratch']
  %s0 = inlined_call_operand.vmem [shape: f32[2,8,16], index: 0, kind: input, shape index: {}]
  %s1 = inlined_call_operand.vmem [shape: f32[2,16,128], index: 1, kind: input, shape index: {}]
  %s2 = inlined_call_operand.vmem [shape: f32[2,8,128], index: 2, kind: output, shape index: {}]
  %s3 = sld [smem:[#allocation0]]
  $region41: #{_global_rel_trafo_impl.1} parent=0
    _
  %s5 = ssub.s32 1, %s3
  %s6 = scalar_select 0, %s5, %s3
  loop: start=0, step=1, limit=4
  $region2: #{_global_rel_trafo_impl.1} parent=0 // loop_pre_header
    _
  $region3: #{_global_rel_trafo_impl.1} parent=0 // loop_header
    %s8 = sphi 0, %s12
    %p9 = scmp.ge.s32.totalorder %s8, 4
    %s15 = sphi 0, %s34
    %s16 = sphi 0, %s30
    %s17 = sphi 0, %s26
    %s18 = sphi 0, %s15
    %s19 = sphi 0, %s16
    %s20 = sphi 0, %s17
    %s21 = sphi 0, %s18
    %s22 = sphi 0, %s19
    %s23 = sphi 0, %s20
    %s39 = sphi 0, %s41
    %s42 = sphi 0, %s39
    %s43 = sphi 0, %s42
    %s59 = sphi 0, %s43
    %s67 = sphi 0, %s69
    %s70 = sphi 0, %s67
    %s71 = sphi 0, %s70
    %s87 = sphi 0, %s71
    %s97 = sphi 0, %s99
    %s100 = sphi 0, %s97
    %s101 = sphi 0, %s100
    %s117 = sphi 0, %s101
  $region4: #{_global_rel_trafo_impl.1} parent=0 // loop_header_branch
    %11 = sbr.rel (%p9) target = $region8
  $region5: #{_global_rel_trafo_impl.1} parent=0 // loop_body
    %s13 = ssub.s32 %s8, 1
    %s14 = ssub.s32 %s8, 2
    %s24 = sadd.s32 1, %s17
    %p25 = scmp.ge.s32.totalorder %s24, 1
    %s26 = scalar_select %p25, 0, %s24
    %s27 = sadd.s32 1, %s16
    %s28 = scalar_select %p25, %s27, %s16
    %p29 = scmp.ge.s32.totalorder %s28, 1
    %s30 = scalar_select %p29, 0, %s28
    %s31 = sadd.s32 1, %s15
    %s32 = scalar_select %p29, %s31, %s15
    %p33 = scmp.ge.s32.totalorder %s32, 2
    %s34 = scalar_select %p33, 0, %s32
    %s35 = ssub.s32 %s15, %s34
    %s36 = ssub.s32 %s17, %s26
    %s37 = sor.u32 %s35, %s36
    %p38 = scmp.eq.s32.totalorder %s37, 0
    %s40 = sadd.s32 %s39, 1
    %s41 = scalar_select %p38, %s39, %s40
    %p44 = pneg %p38
    %p45 = scmp.eq.s32.totalorder %s8, 1
    %p46 = por %p44, %p45
    %p47 = scmp.ne.s32.totalorder %s39, %s42
    %p48 = scmp.eq.s32.totalorder %s8, 0
    %p49 = por %p47, %p48
    %p50 = scmp.ne.s32.totalorder %s39, %s42
    %p51 = scmp.eq.s32.totalorder %s13, 1
    %p52 = por %p50, %p51
    %p53 = scmp.ne.s32.totalorder %s42, %s43
    %p54 = scmp.eq.s32.totalorder %s13, 0
    %p55 = por %p53, %p54
    %p56 = scmp.ne.s32.totalorder %s42, %s43
    %p57 = scmp.eq.s32.totalorder %s14, 1
    %p58 = por %p56, %p57
    %p60 = scmp.ne.s32.totalorder %s43, %s59
    %p61 = scmp.eq.s32.totalorder %s14, 0
    %p62 = por %p60, %p61
    %s63 = ssub.s32 %s15, %s34
    %s64 = ssub.s32 %s16, %s30
    %s65 = sor.u32 %s63, %s64
    %p66 = scmp.eq.s32.totalorder %s65, 0
    %s68 = sadd.s32 %s67, 1
    %s69 = scalar_select %p66, %s67, %s68
    %p72 = pneg %p66
    %p73 = scmp.eq.s32.totalorder %s8, 1
    %p74 = por %p72, %p73
    %p75 = scmp.ne.s32.totalorder %s67, %s70
    %p76 = scmp.eq.s32.totalorder %s8, 0
    %p77 = por %p75, %p76
    %p78 = scmp.ne.s32.totalorder %s67, %s70
    %p79 = scmp.eq.s32.totalorder %s13, 1
    %p80 = por %p78, %p79
    %p81 = scmp.ne.s32.totalorder %s70, %s71
    %p82 = scmp.eq.s32.totalorder %s13, 0
    %p83 = por %p81, %p82
    %p84 = scmp.ne.s32.totalorder %s70, %s71
    %p85 = scmp.eq.s32.totalorder %s14, 1
    %p86 = por %p84, %p85
    %p88 = scmp.ne.s32.totalorder %s71, %s87
    %p89 = scmp.eq.s32.totalorder %s14, 0
    %p90 = por %p88, %p89
    %s91 = ssub.s32 %s15, %s34
    %s92 = ssub.s32 %s17, %s26
    %s93 = sor.u32 %s91, %s92
    %s94 = ssub.s32 %s16, %s30
    %s95 = sor.u32 %s93, %s94
    %p96 = scmp.eq.s32.totalorder %s95, 0
    %s98 = sadd.s32 %s97, 1
    %s99 = scalar_select %p96, %s97, %s98
    %p102 = pneg %p96
    %p103 = scmp.eq.s32.totalorder %s8, 1
    %p104 = por %p102, %p103
    %p105 = scmp.ne.s32.totalorder %s97, %s100
    %p106 = scmp.eq.s32.totalorder %s8, 0
    %p107 = por %p105, %p106
    %p108 = scmp.ne.s32.totalorder %s97, %s100
    %p109 = scmp.eq.s32.totalorder %s13, 1
    %p110 = por %p108, %p109
    %p111 = scmp.ne.s32.totalorder %s100, %s101
    %p112 = scmp.eq.s32.totalorder %s13, 0
    %p113 = por %p111, %p112
    %p114 = scmp.ne.s32.totalorder %s100, %s101
    %p115 = scmp.eq.s32.totalorder %s14, 1
    %p116 = por %p114, %p115
    %p118 = scmp.ne.s32.totalorder %s101, %s117
    %p119 = scmp.eq.s32.totalorder %s14, 0
    %p120 = por %p118, %p119
    %p121 = scmp.le.s32.totalorder 1, %s8
    %p122 = scmp.lt.s32.totalorder %s8, 3
    %p123 = pnand %p121, %p122
    %p124 = pneg %p123
    // Predicated region
    $region9: #{_global_rel_trafo_impl.1} parent=5 // pred_check
      _
    $region10: #{_global_rel_trafo_impl.1} parent=5 // pred_check_branch
      %126 = sbr.rel (%p123) target = $region12
    $region11: #{_global_rel_trafo_impl.1} parent=5 // pred_region
      %s127 = ssub.s32 %s8, 1
    $region12: #{_global_rel_trafo_impl.1} parent=5 // pred_fallthru
      _
    %p128 = scmp.lt.s32.totalorder %s8, 2
    // Predicated region
    $region13: #{_global_rel_trafo_impl.1} parent=5 // pred_check
      %p129 = pneg %p128
    $region14: #{_global_rel_trafo_impl.1} parent=5 // pred_check_branch
      %131 = sbr.rel (%p129) target = $region16
    $region15: #{_global_rel_trafo_impl.1} parent=5 // pred_region
      // Predicated region
      $region17: #{_global_rel_trafo_impl.1} parent=15 // pred_check
        %p132 = pneg %p49
      $region18: #{_global_rel_trafo_impl.1} parent=15 // pred_check_branch
        %134 = sbr.rel (%p132) target = $region20
      $region19: #{_global_rel_trafo_impl.1} parent=15 // pred_region
        %p135 = scmp.lt.s32.totalorder %s15, 1
        %s136 = scalar_select %p135, %s15, 1
        %p137 = scmp.lt.s32.totalorder %s17, 0
        %s138 = scalar_select %p137, %s17, 0
        %s139 = sadd.s32 %s138, %s136
        %s140 = smul.addr %s139, 8
        %s141 = scalar_lea.vmem %s0, %s140
      $region20: #{_global_rel_trafo_impl.1} parent=15 // pred_fallthru
        _
      // Predicated region
      $region21: #{_global_rel_trafo_impl.1} parent=15 // pred_check
        %p142 = pneg %p77
      $region22: #{_global_rel_trafo_impl.1} parent=15 // pred_check_branch
        %144 = sbr.rel (%p142) target = $region24
      $region23: #{_global_rel_trafo_impl.1} parent=15 // pred_region
        %p145 = scmp.lt.s32.totalorder %s15, 1
        %s146 = scalar_select %p145, %s15, 1
        %p147 = scmp.lt.s32.totalorder %s16, 0
        %s148 = scalar_select %p147, %s16, 0
        %s149 = smul.addr %s146, 2
        %s150 = sadd.s32 %s148, %s149
        %s151 = smul.addr %s150, 8
        %s152 = scalar_lea.vmem %s1, %s151
      $region24: #{_global_rel_trafo_impl.1} parent=15 // pred_fallthru
        _
    $region16: #{_global_rel_trafo_impl.1} parent=5 // pred_fallthru
      _
    %p153 = scmp.le.s32.totalorder 1, %s8
    %p154 = scmp.lt.s32.totalorder %s8, 3
    %p155 = pnand %p153, %p154
    %p156 = pneg %p155
    // Predicated region
    $region25: #{_global_rel_trafo_impl.1} parent=5 // pred_check
      _
    $region26: #{_global_rel_trafo_impl.1} parent=5 // pred_check_branch
      %158 = sbr.rel (%p155) target = $region28
    $region27: #{_global_rel_trafo_impl.1} parent=5 // pred_region
      %s159 = ssub.s32 %s8, 1
      %p160 = scmp.lt.s32.totalorder %s18, 1
      %s161 = scalar_select %p160, %s18, 1
      %p162 = scmp.lt.s32.totalorder %s20, 0
      %s163 = scalar_select %p162, %s20, 0
      %s164 = sadd.s32 %s163, %s161
      %s165 = smul.addr %s164, 8
      %s166 = scalar_lea.vmem %s0, %s165
      %p167 = pneg %p55
      %p168 = pneg %p52
      %p169 = scmp.lt.s32.totalorder %s18, 1
      %s170 = scalar_select %p169, %s18, 1
      %p171 = scmp.lt.s32.totalorder %s19, 0
      %s172 = scalar_select %p171, %s19, 0
      %s173 = smul.addr %s170, 2
      %s174 = sadd.s32 %s172, %s173
      %s175 = smul.addr %s174, 8
      %s176 = scalar_lea.vmem %s1, %s175
      %p177 = pneg %p83
      %p178 = pneg %p80
      %p179 = pneg %p113
      %p180 = pneg %p110
      %p181 = scmp.lt.s32.totalorder %s18, 1
      %s182 = scalar_select %p181, %s18, 1
      %p183 = scmp.lt.s32.totalorder %s20, 0
      %s184 = scalar_select %p183, %s20, 0
      %p185 = scmp.lt.s32.totalorder %s19, 0
      %s186 = scalar_select %p185, %s19, 0
      %s187 = sadd.s32 %s186, %s184
      %s188 = sadd.s32 %s187, %s182
      %s189 = smul.addr %s188, 8
      %s190 = scalar_lea.vmem %s2, %s189
      %p191 = scmp.lt.s32.totalorder %s18, 1
      %s192 = scalar_select %p191, %s18, 1
      %p193 = scmp.lt.s32.totalorder %s20, 0
      %s194 = scalar_select %p193, %s20, 0
      %s195 = sadd.s32 %s194, %s192
      %s196 = smul.addr %s195, 8
      %s197 = scalar_lea.vmem %s0, %s196
      %p198 = scmp.lt.s32.totalorder %s18, 1
      %s199 = scalar_select %p198, %s18, 1
      %p200 = scmp.lt.s32.totalorder %s19, 0
      %s201 = scalar_select %p200, %s19, 0
      %s202 = smul.addr %s199, 2
      %s203 = sadd.s32 %s201, %s202
      %s204 = smul.addr %s203, 8
      %s205 = scalar_lea.vmem %s1, %s204
      %p206 = scmp.lt.s32.totalorder %s18, 1
      %s207 = scalar_select %p206, %s18, 1
      %p208 = scmp.lt.s32.totalorder %s20, 0
      %s209 = scalar_select %p208, %s20, 0
      %p210 = scmp.lt.s32.totalorder %s19, 0
      %s211 = scalar_select %p210, %s19, 0
      %s212 = sadd.s32 %s211, %s209
      %s213 = sadd.s32 %s212, %s207
      %s214 = smul.addr %s213, 8
      %s215 = scalar_lea.vmem %s2, %s214
      %v216 = vld [vmem:[%s197] sm:$0xff]
      %v217 = vld [vmem:[%s205] sm:$0xff]
      %v218 = vld [vmem:[%s205 + $0x8] sm:$0xff]
      %vm219 = vcmask 130048
      %v221 = vsel %vm219, %v216, 0
      %223 = vmatprep.subr.mxu0 0.0
      %224 = vmatpush1.msra.mxu0 0.0
      %225 = vmatprep.subr.mxu0 0.0
      %226 = vmatpush1.msra.mxu0 0.0
      %227 = vmatprep.subr.mxu0 0.0
      %228 = vmatpush1.msra.mxu0 0.0
      %229 = vmatprep.subr.mxu0 0.0
      %230 = vmatpush1.msra.mxu0 0.0
      %231 = vmatprep.subr.mxu0 0.0
      %232 = vmatpush1.msra.mxu0 0.0
      %233 = vmatprep.subr.mxu0 0.0
      %234 = vmatpush1.msra.mxu0 0.0
      %235 = vmatprep.subr.mxu0 0.0
      %236 = vmatpush1.msra.mxu0 0.0
      %237 = vmatprep.subr.mxu0 0.0
      %238 = vmatpush1.msra.mxu0 0.0
      %239 = vmatprep.subr.mxu0 0.0
      %240 = vmatpush1.msra.mxu0 0.0
      %241 = vmatprep.subr.mxu0 0.0
      %242 = vmatpush1.msra.mxu0 0.0
      %243 = vmatprep.subr.mxu0 0.0
      %244 = vmatpush1.msra.mxu0 0.0
      %245 = vmatprep.subr.mxu0 0.0
      %246 = vmatpush1.msra.mxu0 0.0
      %247 = vmatprep.subr.mxu0 0.0
      %248 = vmatpush1.msra.mxu0 0.0
      %249 = vmatprep.subr.mxu0 0.0
      %250 = vmatpush1.msra.mxu0 0.0
      %251 = vmatprep.subr.mxu0 0.0
      %252 = vmatpush1.msra.mxu0 %v218
      %253 = vmatprep.subr.mxu0 0.0
      %254 = vmatpush1.msra.mxu0 %v217
      %255 = vmatprep.subr.mxu0 0.0
      %256 = vmatpush2.msra.mxu0 0.0
      %257 = vmatprep.subr.mxu0 0.0
      %258 = vmatpush2.msra.mxu0 0.0
      %259 = vmatprep.subr.mxu0 0.0
      %260 = vmatpush2.msra.mxu0 0.0
      %261 = vmatprep.subr.mxu0 0.0
      %262 = vmatpush2.msra.mxu0 0.0
      %263 = vmatprep.subr.mxu0 0.0
      %264 = vmatpush2.msra.mxu0 0.0
      %265 = vmatprep.subr.mxu0 0.0
      %266 = vmatpush2.msra.mxu0 0.0
      %267 = vmatprep.subr.mxu0 0.0
      %268 = vmatpush2.msra.mxu0 0.0
      %269 = vmatprep.subr.mxu0 0.0
      %270 = vmatpush2.msra.mxu0 0.0
      %271 = vmatprep.subr.mxu0 0.0
      %272 = vmatpush2.msra.mxu0 0.0
      %273 = vmatprep.subr.mxu0 0.0
      %274 = vmatpush2.msra.mxu0 0.0
      %275 = vmatprep.subr.mxu0 0.0
      %276 = vmatpush2.msra.mxu0 0.0
      %277 = vmatprep.subr.mxu0 0.0
      %278 = vmatpush2.msra.mxu0 0.0
      %279 = vmatprep.subr.mxu0 0.0
      %280 = vmatpush2.msra.mxu0 0.0
      %281 = vmatprep.subr.mxu0 0.0
      %282 = vmatpush2.msra.mxu0 0.0
      %283 = vmatprep.subr.mxu0 0.0
      %284 = vmatpush2.msra.mxu0 0.0
      %285 = vmatprep.subr.mxu0 0.0
      %286 = vmatpush2.msra.mxu0 0.0
      %287 = vmatprep.mubr.f32.mxu0 0.0
      %288 = vmatmul.mubr.f32.gmra.mxu0 %v221
      %v289 = vpop.f32.mrf.mxu0
      %v290 = vadd.f32 0.0, %v289
      %v291 = vpop.f32.mrf.mxu0
      %292 = vdwg.mxu0
      %293 = vst [vmem:[%s215] sm:$0xff] %v290
      %p294 = scmp.lt.s32.totalorder %s18, 1
      %s295 = scalar_select %p294, %s18, 1
      %p296 = scmp.lt.s32.totalorder %s20, 0
      %s297 = scalar_select %p296, %s20, 0
      %p298 = scmp.lt.s32.totalorder %s19, 0
      %s299 = scalar_select %p298, %s19, 0
      %s300 = sadd.s32 %s299, %s297
      %s301 = sadd.s32 %s300, %s295
      %s302 = smul.addr %s301, 8
      %s303 = scalar_lea.vmem %s2, %s302
      // Predicated region
      $region29: #{_global_rel_trafo_impl.1} parent=27 // pred_check
        %p304 = pneg %p110
      $region30: #{_global_rel_trafo_impl.1} parent=27 // pred_check_branch
        %306 = sbr.rel (%p304) target = $region32
      $region31: #{_global_rel_trafo_impl.1} parent=27 // pred_region
        _
      $region32: #{_global_rel_trafo_impl.1} parent=27 // pred_fallthru
        _
    $region28: #{_global_rel_trafo_impl.1} parent=5 // pred_fallthru
      _
    %p307 = scmp.le.s32.totalorder 2, %s8
    // Predicated region
    $region33: #{_global_rel_trafo_impl.1} parent=5 // pred_check
      %p308 = pneg %p307
    $region34: #{_global_rel_trafo_impl.1} parent=5 // pred_check_branch
      %310 = sbr.rel (%p308) target = $region36
    $region35: #{_global_rel_trafo_impl.1} parent=5 // pred_region
      %s311 = ssub.s32 %s8, 2
      // Predicated region
      $region37: #{_global_rel_trafo_impl.1} parent=35 // pred_check
        %p312 = pneg %p116
      $region38: #{_global_rel_trafo_impl.1} parent=35 // pred_check_branch
        %314 = sbr.rel (%p312) target = $region40
      $region39: #{_global_rel_trafo_impl.1} parent=35 // pred_region
        %p315 = scmp.lt.s32.totalorder %s21, 1
        %s316 = scalar_select %p315, %s21, 1
        %p317 = scmp.lt.s32.totalorder %s23, 0
        %s318 = scalar_select %p317, %s23, 0
        %p319 = scmp.lt.s32.totalorder %s22, 0
        %s320 = scalar_select %p319, %s22, 0
        %s321 = sadd.s32 %s320, %s318
        %s322 = sadd.s32 %s321, %s316
        %s323 = smul.addr %s322, 8
        %s324 = scalar_lea.vmem %s2, %s323
      $region40: #{_global_rel_trafo_impl.1} parent=35 // pred_fallthru
        _
    $region36: #{_global_rel_trafo_impl.1} parent=5 // pred_fallthru
      _
  $region6: #{_global_rel_trafo_impl.1} parent=0 // loop_footer
    %s12 = sadd.s32 1, %s8
  $region7: #{_global_rel_trafo_impl.1} parent=0 // loop_footer_branch
    %7 = sbr.rel target = $region3
  $region8: #{_global_rel_trafo_impl.1} parent=0 // loop_exit
    _

</llo_original>
